<compile_context>
chip_gen: v5e
topology: v5e:2x2
jax: 0.10.0
libtpu: 0.0.40
codegen_flags: <defaults>
</compile_context>

<pallas_src>
import functools

import jax
import jax.numpy as jnp
from jax.experimental import pallas as pl
from jax.experimental.pallas import tpu as pltpu


def _prescale_norm_kernel(g_ref, x_ref, o_ref, *, eps):
    # g_ref: SMEM scalar-prefetch ref, shape (1,), f32.
    # x_ref/o_ref: VMEM tiles of shape (TILE_R, hidden).
    x = x_ref[...]
    xf = x.astype(jnp.float32)                                   # f32 accumulation
    sq_sum = jnp.sum(xf * xf, axis=-1, keepdims=True)            # (TILE_R, 1)
    # 1 / max(sqrt(s), eps) == rsqrt(max(s, eps^2))  (sqrt is monotone)
    inv_n = jax.lax.rsqrt(jnp.maximum(sq_sum, eps * eps))        # EUP slot, ~free
    scale = inv_n * g_ref[0]                                     # fold g into scale
    o_ref[...] = (xf * scale).astype(o_ref.dtype)                # single VPU pass


def _choose_tile_rows(rows, hidden, dtype, target_bytes=4 * 1024 * 1024):
    """Pick a row-tile: ~target_bytes per buffer, multiple of the sublane pack."""
    itemsize = jnp.dtype(dtype).itemsize
    sublane = max(8, 32 // itemsize)          # 8 for f32, 16 for bf16, 32 for 8-bit
    bytes_per_row = max(hidden * itemsize, 1)
    tile = target_bytes // bytes_per_row
    if tile >= rows:
        return rows                            # whole array in one (small) block
    tile = max((tile // sublane) * sublane, sublane)
    return min(tile, rows)


def prescale_norm(x, g, eps=1e-5, fn=None, tile_rows=None):
    """x: (batch, seq, hidden). g: scalar parameter array of shape (1,)."""
    batch, seq, hidden = x.shape
    rows = batch * seq
    x2d = x.reshape(rows, hidden)

    tile_r = tile_rows if tile_rows is not None else _choose_tile_rows(
        rows, hidden, x.dtype)
    grid = (pl.cdiv(rows, tile_r),)

    itemsize = jnp.dtype(x.dtype).itemsize
    cost = pl.CostEstimate(
        flops=3 * rows * hidden,               # square, reduce-add, scale
        transcendentals=rows,                  # one rsqrt per row
        bytes_accessed=2 * rows * hidden * itemsize,
    )

    out2d = pl.pallas_call(
        functools.partial(_prescale_norm_kernel, eps=eps),
        out_shape=jax.ShapeDtypeStruct((rows, hidden), x.dtype),
        grid_spec=pltpu.PrefetchScalarGridSpec(
            num_scalar_prefetch=1,                                   # g -> SMEM
            grid=grid,
            in_specs=[
                pl.BlockSpec((tile_r, hidden), lambda i, g: (i, 0)),  # x tile
            ],
            out_specs=pl.BlockSpec((tile_r, hidden), lambda i, g: (i, 0)),
        ),
        compiler_params=pltpu.CompilerParams(
            dimension_semantics=("parallel",),          # rows independent; v7x 2-TC
            vmem_limit_bytes=48 * 1024 * 1024,          # headroom for 4x ~4 MiB bufs
        ),
        cost_estimate=cost,
    )(g.astype(jnp.float32), x2d)

    out = out2d.reshape(batch, seq, hidden)
    if fn is not None:
        out = fn(out)
    return out


def prescale_norm_ref(x, g, eps=1e-5, fn=None):
    """Pure-JAX reference mirroring the PyTorch forward."""
    xf = x.astype(jnp.float32)
    n = jnp.sqrt(jnp.sum(xf * xf, axis=-1, keepdims=True))
    n = jnp.maximum(n, eps)
    out = (xf / n * g[0]).astype(x.dtype)
    if fn is not None:
        out = fn(out)
    return out


if __name__ == "__main__":
    key = jax.random.PRNGKey(0)

    # Deterministic parameter init: g = ones(1), as in nn.Parameter(torch.ones(1))
    g = jnp.ones((1,), dtype=jnp.float32)
    # fn: the wrapped module; identity here (PreScaleNorm is agnostic to it).
    fn = lambda y: y

    # --- primary small test (matches the module's typical layout) ---
    batch, seq, hidden = 2, 8, 32
    x = jax.random.normal(key, (batch, seq, hidden), dtype=jnp.float32)
    out = jax.block_until_ready(prescale_norm(x, g, eps=1e-5, fn=fn))
    ref = prescale_norm_ref(x, g, eps=1e-5, fn=fn)
    assert out.shape == x.shape
    assert jnp.allclose(out, ref, atol=1e-5, rtol=1e-5), "mismatch vs reference (f32)"

    # --- non-unit g test (exercise the learnable scale path) ---
    g2 = jnp.full((1,), 1.75, dtype=jnp.float32)
    out_g = jax.block_until_ready(prescale_norm(x, g2, eps=1e-5, fn=fn))
    ref_g = prescale_norm_ref(x, g2, eps=1e-5, fn=fn)
    assert jnp.allclose(out_g, ref_g, atol=1e-5, rtol=1e-5), "mismatch vs reference (g)"

    # --- tiling / edge-block test: rows not a multiple of the forced tile ---
    key2 = jax.random.PRNGKey(1)
    x2 = jax.random.normal(key2, (5, 8, 128), dtype=jnp.float32)   # rows=40
    out2 = jax.block_until_ready(
        prescale_norm(x2, g, eps=1e-5, fn=fn, tile_rows=16))        # grid=3, last partial
    ref2 = prescale_norm_ref(x2, g, eps=1e-5, fn=fn)
    assert jnp.allclose(out2, ref2, atol=1e-5, rtol=1e-5), "mismatch vs reference (tiled)"

    print("KERNEL_OK")
</pallas_src>

<mosaic_0001>
module attributes {stable_mosaic.version = 11 : i64} {
  func.func @_prescale_norm_kernel(%arg0: i32, %arg1: memref<1xf32, #tpu.memory_space<smem>>, %arg2: memref<16x32xf32, #tpu.memory_space<vmem>>, %arg3: memref<16x32xf32, #tpu.memory_space<vmem>>) attributes {dimension_semantics = [#tpu.dimension_semantics<parallel>], iteration_bounds = array<i64: 1>, scalar_prefetch = 1 : i64, scratch_operands = 0 : i64, tpu.core_type = #tpu.core_type<tc>, window_params = [{transform_indices = @transform_0, window_bounds = array<i64: 16, 32>}, {transform_indices = @transform_1, window_bounds = array<i64: 16, 32>}]} {
    %c0 = arith.constant 0 : index
    %c0_0 = arith.constant 0 : index
    %0 = vector.load %arg2[%c0, %c0_0] : memref<16x32xf32, #tpu.memory_space<vmem>>, vector<16x32xf32>
    %1 = arith.mulf %0, %0 : vector<16x32xf32>
    %cst = arith.constant dense<0.000000e+00> : vector<16xf32>
    %2 = vector.multi_reduction <add>, %1, %cst [1] : vector<16x32xf32> to vector<16xf32>
    %3 = vector.shape_cast %2 : vector<16xf32> to vector<16x1xf32>
    %cst_1 = arith.constant 1.000000e-10 : f32
    %4 = vector.broadcast %cst_1 : f32 to vector<16x1xf32>
    %5 = arith.maximumf %3, %4 : vector<16x1xf32>
    %6 = math.rsqrt %5 : vector<16x1xf32>
    %c0_2 = arith.constant 0 : index
    %7 = memref.load %arg1[%c0_2] : memref<1xf32, #tpu.memory_space<smem>>
    %8 = vector.broadcast %7 : f32 to vector<16x1xf32>
    %9 = arith.mulf %6, %8 : vector<16x1xf32>
    %10 = vector.broadcast %9 : vector<16x1xf32> to vector<16x32xf32>
    %11 = arith.mulf %0, %10 : vector<16x32xf32>
    %c0_3 = arith.constant 0 : index
    %c0_4 = arith.constant 0 : index
    %12 = vector.load %arg3[%c0_3, %c0_4] : memref<16x32xf32, #tpu.memory_space<vmem>>, vector<16x32xf32>
    tpu.vector_store %arg3[%c0_3, %c0_4], %11 {strides = array<i32>} : memref<16x32xf32, #tpu.memory_space<vmem>>, vector<16x32xf32>,
    return
  }
  func.func @transform_0(%arg0: i32, %arg1: memref<1xf32, #tpu.memory_space<smem>>) -> (i32, i32) {
    %c0_i32 = arith.constant 0 : i32
    %c0_i32_0 = arith.constant 0 : i32
    return %arg0, %c0_i32 : i32, i32
  }
  func.func @transform_1(%arg0: i32, %arg1: memref<1xf32, #tpu.memory_space<smem>>) -> (i32, i32) {
    %c0_i32 = arith.constant 0 : i32
    %c0_i32_0 = arith.constant 0 : i32
    return %arg0, %c0_i32 : i32, i32
  }
}

</mosaic_0001>

<llo_original>
// kernel: tpu_custom_call.1
$region0: #{tpu_custom_call.1}
  #allocation0 [shape = 'u32[]', space=smem, size = 0x4, offset = 0x4, fixed_abs, tag = 'smem constant byte address 0x4 - core index']
  #allocation1 [shape = 'u32[72,128]{1,0:T(1,128)}', space=vmem, size = 0x9000, scoped, tag = 'internal scratch']
  #allocation2 [shape = 's32[1]{0}', space=sflag, size = 0x4, scoped, tag = 'scoped memory for tpu_custom_call.1']
  #allocation3 [shape = 'f32[1]{0:T(128)S(6)}', space=smem, size = 0x200, scoped, tag = 'prefetched SMEM operand 0']
  %s0 = inlined_call_operand.<no memory space> [shape: f32[1], index: 0, kind: input, shape index: {}]
  %s1 = inlined_call_operand.hbm [shape: f32[16,32], index: 1, kind: input, shape index: {}]
  %s2 = inlined_call_operand.hbm [shape: f32[16,32], index: 2, kind: output, shape index: {}]
  %s3 = sld [smem:[#allocation0]]
  $region18: #{tpu_custom_call.1} parent=0
    _
  %s5 = ssub.s32 1, %s3
  %s6 = scalar_select 0, %s5, %s3
  %7 = sst [smem:[#allocation3]] %s0
  $region1: #{tpu_custom_call.1} parent=0
    #allocation4 [shape = 'u8[8192]{0}', space=vmem, size = 0x2000, scoped, tag = 'input window, operand 1, single buffered']
    #allocation5 [shape = 's32[1]{0}', space=sflag, size = 0x4, scoped, tag = 'scoped memory for tpu_custom_call.1']
    #allocation6 [shape = 's32[1]{0}', space=sflag, size = 0x4, scoped, tag = 'scoped memory for tpu_custom_call.1']
    #allocation7 [shape = 'u8[8192]{0}', space=vmem, size = 0x2000, scoped, tag = 'output window, operand 0, single buffered']
    %8 = vsyncpa [#allocation5], 0
    %9 = vsyncpa [#allocation6], 0
    // Predicated region
    $region2: #{tpu_custom_call.1} parent=1 // pred_check
      _
    $region3: #{tpu_custom_call.1} parent=1 // pred_check_branch
      %11 = sbr.rel (0) target = $region5
    $region4: #{tpu_custom_call.1} parent=1 // pred_region
      %13 = vsyncadd [#allocation5], 0
      %s14 = sshll.u32 %s1, 4
      %s15 = int_to_ptr.hbm [resolvable:$true] %s14
      %s16 = sshll.u32 [#allocation4], 4
      %s17 = int_to_ptr.vmem [resolvable:$true] %s16
      %22 = dma.hbm_to_vmem [thread:$0]  %s15, 256, %s17, [#allocation5], 128, 128, 8
    $region5: #{tpu_custom_call.1} parent=1 // pred_fallthru
      _
    // Predicated region
    $region6: #{tpu_custom_call.1} parent=1 // pred_check
      _
    $region7: #{tpu_custom_call.1} parent=1 // pred_check_branch
      %24 = sbr.rel (0) target = $region9
    $region8: #{tpu_custom_call.1} parent=1 // pred_region
      %26 = dma.done [#allocation5], 256
    $region9: #{tpu_custom_call.1} parent=1 // pred_fallthru
      _
    %v27 = vld [vmem:[#allocation4] sm:$0xff]
    %v28 = vld [vmem:[#allocation4 + $0x8] sm:$0xff]
    %v29 = vmul.f32 %v27, %v27
    %v30 = vmul.f32 %v28, %v28
    %vm31 = vcmask 261120
    %v32 = vsel %vm31, %v29, 0.0
    %33 = vadd.xlane.f32.xlu0 %v32
    %v34 = vpop.xlane.xlu0 %33
    %v35 = vsel %vm31, %v30, 0.0
    %36 = vadd.xlane.f32.xlu0 %v35
    %v37 = vpop.xlane.xlu0 %36
    %v38 = vmax.f32 %v34, 1e-10
    %v39 = vmax.f32 %v37, 1e-10
    %v40 = vrsqrt.pop %v38
    %v41 = vmul.f32 %v40, %v38
    %v42 = vmul.f32 %v41, %v40
    %v43 = vmul.f32 0.5, %v42
    %v44 = vsub.f32 1.5, %v43
    %v45 = vmul.f32 %v40, %v44
    %vm46 = vweird.f32 %v38
    %vm47 = vweird.f32 %v40
    %vm48 = vmor %vm46, %vm47
    %v49 = vsel %vm48, %v40, %v45
    %v50 = vrsqrt.pop %v39
    %v51 = vmul.f32 %v50, %v39
    %v52 = vmul.f32 %v51, %v50
    %v53 = vmul.f32 0.5, %v52
    %v54 = vsub.f32 1.5, %v53
    %v55 = vmul.f32 %v50, %v54
    %vm56 = vweird.f32 %v39
    %vm57 = vweird.f32 %v50
    %vm58 = vmor %vm56, %vm57
    %v59 = vsel %vm58, %v50, %v55
    %s60 = sld [smem:[#allocation3]]
    %v61 = vstv %s60
    %v62 = vmul.f32 %v49, %v61
    %v63 = vmul.f32 %v59, %v61
    %v64 = vmul.f32 %v27, %v62
    %v65 = vmul.f32 %v28, %v63
    %66 = vst.msk [vmem:[#allocation7] sm:$0xff] %vm31, %v64
    %67 = vst.msk [vmem:[#allocation7 + $0x8] sm:$0xff] %vm31, %v65
    // Predicated region
    $region10: #{tpu_custom_call.1} parent=1 // pred_check
      _
    $region11: #{tpu_custom_call.1} parent=1 // pred_check_branch
      %69 = sbr.rel (0) target = $region13
    $region12: #{tpu_custom_call.1} parent=1 // pred_region
      %71 = vsyncadd [#allocation6], 0
      %s72 = sshll.u32 [#allocation7], 4
      %s73 = int_to_ptr.vmem [resolvable:$true] %s72
      %s74 = sshll.u32 %s2, 4
      %s75 = int_to_ptr.hbm [resolvable:$true] %s74
      %80 = dma.vmem_to_hbm [thread:$0]  %s73, 256, %s75, [#allocation6], 128, 128, 8
    $region13: #{tpu_custom_call.1} parent=1 // pred_fallthru
      _
    // Predicated region
    $region14: #{tpu_custom_call.1} parent=1 // pred_check
      _
    $region15: #{tpu_custom_call.1} parent=1 // pred_check_branch
      %82 = sbr.rel (0) target = $region17
    $region16: #{tpu_custom_call.1} parent=1 // pred_region
      %84 = dma.done [#allocation6], 256
    $region17: #{tpu_custom_call.1} parent=1 // pred_fallthru
      _
    %85 = vsyncpa [#allocation5], 1
    %86 = vsyncpa [#allocation6], 1

</llo_original>
